<compile_context>
chip_gen: v7x
topology: tpu7x:2x2x1
jax: 0.10.0
libtpu: 0.0.40
codegen_flags: <defaults>
</compile_context>

<pallas_src>
import functools
import math

import jax
import jax.numpy as jnp
from jax import lax
from jax.experimental import pallas as pl
from jax.experimental.pallas import tpu as pltpu


# ---------------------------------------------------------------------------
# helpers
# ---------------------------------------------------------------------------
def _pick_tile(n, preferred):
    """Largest MXU-friendly tile from `preferred` that divides n; if nothing
    divides, still use a fixed tile with a pl.cdiv grid (boundary blocks are
    write-masked / score-masked); tiny extents use the full dimension."""
    for t in preferred:
        if n >= t and n % t == 0:
            return t
    for t in preferred:
        if n > t:
            return t
    return n


def _vmem_limit_bytes():
    """~3/4 of physical VMEM (128 MiB on v5e/v6e, 64 MiB/TC on v7x)."""
    try:
        cap = pltpu.get_tpu_info().vmem_capacity_bytes
        return int(min(max(cap * 3 // 4, 32 * 1024 * 1024), 96 * 1024 * 1024))
    except Exception:
        return 48 * 1024 * 1024


# ---------------------------------------------------------------------------
# Kernel 1: fused Q/K/V projection
#   (xq, xk, xv) @ (wq|wk|wv) + (bq|bk|bv) -> stacked (3, M, Dm)
# ---------------------------------------------------------------------------
def _qkv_proj_kernel(xq_ref, xk_ref, xv_ref, w_ref, b_ref, o_ref, *, compute_dtype):
    # xq/xk/xv: (TM, Dm)  w: (3, Dm, TN)  b: (3, 1, TN)  o: (3, TM, TN)
    for p, x_ref in enumerate((xq_ref, xk_ref, xv_ref)):
        x = x_ref[...].astype(compute_dtype)
        acc = jnp.dot(x, w_ref[p], preferred_element_type=jnp.float32)
        o_ref[p] = (acc + b_ref[p]).astype(o_ref.dtype)


def qkv_projection(xq, xk, xv, w_qkv, b_qkv, *, compute_dtype, vmem_limit_bytes=None):
    """xq/xk/xv: (M, Dm); w_qkv: (3, Dm, Dm); b_qkv: (3, 1, Dm) -> (3, M, Dm)."""
    M, Dm = xq.shape
    if vmem_limit_bytes is None:
        vmem_limit_bytes = _vmem_limit_bytes()

    TM = _pick_tile(M, (1024, 512, 256, 128))
    TN = _pick_tile(Dm, (512, 256, 128))
    n_tiles, m_tiles = pl.cdiv(Dm, TN), pl.cdiv(M, TM)
    # M is the innermost grid axis so the (3, Dm, TN) weight tile stays
    # VMEM-resident across the whole row sweep (fetched once per Dout tile).
    grid = (n_tiles, m_tiles)

    itemsize = jnp.dtype(compute_dtype).itemsize
    cost = pl.CostEstimate(
        flops=int(3 * 2 * M * Dm * Dm),
        transcendentals=0,
        bytes_accessed=int(itemsize * (3 * M * Dm * n_tiles + 3 * Dm * Dm
                                       + 3 * Dm + 3 * M * Dm)),
    )

    kernel = functools.partial(_qkv_proj_kernel, compute_dtype=compute_dtype)
    return pl.pallas_call(
        kernel,
        out_shape=jax.ShapeDtypeStruct((3, M, Dm), compute_dtype),
        grid_spec=pltpu.PrefetchScalarGridSpec(
            num_scalar_prefetch=0,
            grid=grid,
            in_specs=[
                pl.BlockSpec((TM, Dm), lambda n, i: (i, 0)),       # xq tile
                pl.BlockSpec((TM, Dm), lambda n, i: (i, 0)),       # xk tile
                pl.BlockSpec((TM, Dm), lambda n, i: (i, 0)),       # xv tile
                pl.BlockSpec((3, Dm, TN), lambda n, i: (0, 0, n)),  # stacked weights
                pl.BlockSpec((3, 1, TN), lambda n, i: (0, 0, n)),   # stacked biases
            ],
            out_specs=pl.BlockSpec((3, TM, TN), lambda n, i: (0, i, n)),
        ),
        compiler_params=pltpu.CompilerParams(
            dimension_semantics=("parallel", "parallel"),
            vmem_limit_bytes=vmem_limit_bytes,
        ),
        cost_estimate=cost,
    )(xq, xk, xv, w_qkv, b_qkv)


# ---------------------------------------------------------------------------
# Kernel 2: output linear  y = x @ w + b
# ---------------------------------------------------------------------------
def _linear_kernel(x_ref, w_ref, b_ref, o_ref, *, compute_dtype):
    x = x_ref[...].astype(compute_dtype)
    acc = jnp.dot(x, w_ref[...], preferred_element_type=jnp.float32)
    o_ref[...] = (acc + b_ref[...]).astype(o_ref.dtype)


def linear(x2d, w, b, *, out_dtype=None, compute_dtype=None, vmem_limit_bytes=None):
    """x2d: (M, Din) @ w: (Din, Dout) + b: (1, Dout) -> (M, Dout)."""
    M, Din = x2d.shape
    Dout = w.shape[1]
    out_dtype = x2d.dtype if out_dtype is None else out_dtype
    compute_dtype = x2d.dtype if compute_dtype is None else compute_dtype
    if vmem_limit_bytes is None:
        vmem_limit_bytes = _vmem_limit_bytes()

    TM = _pick_tile(M, (1024, 512, 256, 128))
    TN = _pick_tile(Dout, (512, 256, 128))
    n_tiles, m_tiles = pl.cdiv(Dout, TN), pl.cdiv(M, TM)
    grid = (n_tiles, m_tiles)   # rows innermost -> weight tile VMEM-resident

    itemsize = jnp.dtype(compute_dtype).itemsize
    cost = pl.CostEstimate(
        flops=int(2 * M * Din * Dout),
        transcendentals=0,
        bytes_accessed=int(itemsize * (M * Din * n_tiles + Din * Dout
                                       + Dout + M * Dout)),
    )

    kernel = functools.partial(_linear_kernel, compute_dtype=compute_dtype)
    return pl.pallas_call(
        kernel,
        out_shape=jax.ShapeDtypeStruct((M, Dout), out_dtype),
        grid_spec=pltpu.PrefetchScalarGridSpec(
            num_scalar_prefetch=0,
            grid=grid,
            in_specs=[
                pl.BlockSpec((TM, Din), lambda n, i: (i, 0)),
                pl.BlockSpec((Din, TN), lambda n, i: (0, n)),
                pl.BlockSpec((1, TN), lambda n, i: (0, n)),
            ],
            out_specs=pl.BlockSpec((TM, TN), lambda n, i: (i, n)),
        ),
        compiler_params=pltpu.CompilerParams(
            dimension_semantics=("parallel", "parallel"),
            vmem_limit_bytes=vmem_limit_bytes,
        ),
        cost_estimate=cost,
    )(x2d, w, b)


# ---------------------------------------------------------------------------
# Kernel 3: flash-attention forward, all heads per tile (no head transposes)
# ---------------------------------------------------------------------------
def _mha_flash_kernel(q_ref, k_ref, v_ref, o_ref, m_sc, l_sc, acc_sc, *,
                      h, d_k, s_len, tk):
    ki = pl.program_id(2)

    @pl.when(ki == 0)
    def _init():
        m_sc[...] = jnp.full_like(m_sc, -jnp.inf)
        l_sc[...] = jnp.zeros_like(l_sc)
        acc_sc[...] = jnp.zeros_like(acc_sc)

    q = q_ref[...]          # (TQ, h*d_k) in compute dtype
    k = k_ref[...]          # (TK, h*d_k)
    v = v_ref[...]          # (TK, h*d_k)
    tq = q.shape[0]

    # kv-tail mask only emitted when TK does not divide the sequence length.
    masked = (s_len % tk) != 0
    if masked:
        col = ki * tk + lax.broadcasted_iota(jnp.int32, (1, tk), 1)
        kv_valid = col < s_len                                  # (1, TK)

    alpha_parts, pv_parts = [], []
    for hh in range(h):
        sl = slice(hh * d_k, (hh + 1) * d_k)
        q_h, k_h, v_h = q[:, sl], k[:, sl], v[:, sl]

        # Scores (TQ, TK), f32 accumulation on the MXU. The 1/sqrt(d_k) scale
        # is folded into Wq/bq at parameter-prep time (no per-score multiply).
        s = lax.dot_general(q_h, k_h, (((1,), (1,)), ((), ())),
                            preferred_element_type=jnp.float32)
        if masked:
            s = jnp.where(kv_valid, s, jnp.float32(-1e30))

        m_prev = m_sc[hh]                                       # (TQ, 1)
        m_new = jnp.maximum(m_prev, s.max(axis=-1, keepdims=True))
        alpha = jnp.exp(m_prev - m_new)                         # (TQ, 1)
        p = jnp.exp(s - m_new)                                  # (TQ, TK)
        l_sc[hh] = alpha * l_sc[hh] + p.sum(axis=-1, keepdims=True)
        m_sc[hh] = m_new

        pv = jnp.dot(p.astype(v_h.dtype), v_h,
                     preferred_element_type=jnp.float32)        # (TQ, d_k)
        alpha_parts.append(jnp.broadcast_to(alpha, (tq, d_k)))
        pv_parts.append(pv)

    # One lane-dense (TQ, h*d_k) accumulator update instead of h narrow ones.
    alpha_full = jnp.concatenate(alpha_parts, axis=-1)
    pv_full = jnp.concatenate(pv_parts, axis=-1)
    acc_sc[...] = alpha_full * acc_sc[...] + pv_full

    @pl.when(ki == pl.num_programs(2) - 1)
    def _finalize():
        # F.dropout(p_attn) is identity in eval mode.
        inv_parts = [jnp.broadcast_to(pl.reciprocal(l_sc[hh], approx=True),
                                      (tq, d_k)) for hh in range(h)]
        inv_full = jnp.concatenate(inv_parts, axis=-1)
        o_ref[...] = (acc_sc[...] * inv_full).astype(o_ref.dtype)


def flash_attention(qkv, *, h, vmem_limit_bytes=None):
    """qkv: (3, B, S, h*d_k) stacked projected q/k/v -> context (B, S, h*d_k)."""
    _, B, S, Dm = qkv.shape
    assert Dm % h == 0
    d_k = Dm // h
    if vmem_limit_bytes is None:
        vmem_limit_bytes = _vmem_limit_bytes()

    TQ = _pick_tile(S, (512, 256, 128))
    TK = _pick_tile(S, (1024, 512, 256, 128))   # decoupled, larger kv tiles
    q_tiles, kv_tiles = pl.cdiv(S, TQ), pl.cdiv(S, TK)
    grid = (B, q_tiles, kv_tiles)               # kv reduction axis last

    itemsize = jnp.dtype(qkv.dtype).itemsize
    cost = pl.CostEstimate(
        flops=int(4 * B * S * S * Dm),
        transcendentals=int(B * h * S * S),
        bytes_accessed=int(itemsize * (2 * B * S * Dm               # Q in, ctx out
                                       + 2 * B * q_tiles * S * Dm)),  # K/V re-reads
    )

    kernel = functools.partial(_mha_flash_kernel, h=h, d_k=d_k, s_len=S, tk=TK)
    return pl.pallas_call(
        kernel,
        out_shape=jax.ShapeDtypeStruct((B, S, Dm), qkv.dtype),
        grid_spec=pltpu.PrefetchScalarGridSpec(
            num_scalar_prefetch=0,
            grid=grid,
            in_specs=[
                # Same stacked array passed three times; the leading block index
                # picks the q / k / v slab, so no slicing copies at the XLA level.
                pl.BlockSpec((None, None, TQ, Dm), lambda b, qi, ki: (0, b, qi, 0)),
                pl.BlockSpec((None, None, TK, Dm), lambda b, qi, ki: (1, b, ki, 0)),
                pl.BlockSpec((None, None, TK, Dm), lambda b, qi, ki: (2, b, ki, 0)),
            ],
            out_specs=pl.BlockSpec((None, TQ, Dm), lambda b, qi, ki: (b, qi, 0)),
            scratch_shapes=[
                pltpu.VMEM((h, TQ, 1), jnp.float32),   # running max, per head
                pltpu.VMEM((h, TQ, 1), jnp.float32),   # running denom, per head
                pltpu.VMEM((TQ, Dm), jnp.float32),     # lane-dense output accumulator
            ],
        ),
        compiler_params=pltpu.CompilerParams(
            dimension_semantics=("parallel", "parallel", "arbitrary"),
            vmem_limit_bytes=vmem_limit_bytes,
        ),
        cost_estimate=cost,
    )(qkv, qkv, qkv)


# ---------------------------------------------------------------------------
# Full MultiHeadAttention forward (eval mode, mask=None)
# ---------------------------------------------------------------------------
def multi_head_attention(query, key, value, params, h, *, compute_dtype=jnp.bfloat16):
    """query/key/value: (B, S, d_model) -> (B, S, d_model)."""
    wq, bq, wk, bk, wv, bv, wo, bo = params
    B, S, Dm = query.shape
    assert Dm % h == 0
    d_k = Dm // h
    M = B * S

    # Fold the 1/sqrt(d_k) attention scale into Wq/bq (zero in-kernel cost;
    # in production this stacking/scaling is done once at parameter-prep time).
    scale = 1.0 / math.sqrt(d_k)
    w_qkv = jnp.stack([wq * scale, wk, wv]).astype(compute_dtype)   # (3, Dm, Dm)
    b_qkv = jnp.stack([bq * scale, bk, bv]).astype(compute_dtype)   # (3, 1, Dm)

    # Fused Q/K/V projection: one launch, each activation read from HBM once.
    qkv = qkv_projection(query.reshape(M, Dm), key.reshape(M, Dm),
                         value.reshape(M, Dm), w_qkv, b_qkv,
                         compute_dtype=compute_dtype)               # (3, M, Dm)
    # Free reshape — heads stay packed in the last dim; no split transpose.
    qkv = qkv.reshape(3, B, S, Dm)

    ctx = flash_attention(qkv, h=h)                                 # (B, S, Dm)

    # Context is already (B, S, h*d_k): no merge-heads transpose before the
    # output projection.
    out = linear(ctx.reshape(M, Dm), wo.astype(compute_dtype),
                 bo.astype(compute_dtype), out_dtype=query.dtype,
                 compute_dtype=compute_dtype)
    return out.reshape(B, S, Dm)


# ---------------------------------------------------------------------------
# Parameter init (mimics nn.Linear default uniform +-1/sqrt(fan_in);
# weights stored already transposed: (Din, Dout), so kernels do x @ w)
# ---------------------------------------------------------------------------
def init_params(key, d_model, dtype=jnp.float32):
    keys = jax.random.split(key, 8)
    bound = 1.0 / (d_model ** 0.5)
    params = []
    for i in range(4):  # q, k, v, out projections
        w = jax.random.uniform(keys[2 * i], (d_model, d_model), dtype, -bound, bound)
        b = jax.random.uniform(keys[2 * i + 1], (1, d_model), dtype, -bound, bound)
        params.extend([w, b])
    return tuple(params)


# ---------------------------------------------------------------------------
# Pure-JAX reference (mirrors the PyTorch forward with mask=None, eval mode)
# ---------------------------------------------------------------------------
def reference_mha(q, k, v, params, h):
    wq, bq, wk, bk, wv, bv, wo, bo = params
    B, S, Dm = q.shape
    d_k = Dm // h

    def proj(x, w, b):
        return ((x.reshape(B * S, Dm) @ w + b)
                .reshape(B, S, h, d_k).transpose(0, 2, 1, 3))

    qp, kp, vp = proj(q, wq, bq), proj(k, wk, bk), proj(v, wv, bv)
    scores = jnp.einsum("bhqd,bhkd->bhqk", qp, kp) / math.sqrt(d_k)
    p = jax.nn.softmax(scores, axis=-1)
    ctx = jnp.einsum("bhqk,bhkd->bhqd", p, vp)
    ctx = ctx.transpose(0, 2, 1, 3).reshape(B * S, Dm)
    return (ctx @ wo + bo).reshape(B, S, Dm)


if __name__ == "__main__":
    batch, seq, d_model, heads = 2, 8, 32, 4
    key = jax.random.PRNGKey(0)
    kq, kk, kv_, kp = jax.random.split(key, 4)
    q = jax.random.normal(kq, (batch, seq, d_model), jnp.float32)
    k = jax.random.normal(kk, (batch, seq, d_model), jnp.float32)
    v = jax.random.normal(kv_, (batch, seq, d_model), jnp.float32)
    params = init_params(kp, d_model)

    ref = reference_mha(q, k, v, params, heads)

    # f32 compute path: tight check of the kernel structure / online softmax.
    y32 = multi_head_attention(q, k, v, params, heads, compute_dtype=jnp.float32)
    jax.block_until_ready(y32)
    assert y32.shape == (batch, seq, d_model)
    err32 = float(jnp.max(jnp.abs(y32 - ref)))
    assert jnp.allclose(y32, ref, atol=1e-2, rtol=1e-2), err32

    # bf16 compute path (production config: bf16 MXU inputs, f32 accumulation).
    ybf = multi_head_attention(q, k, v, params, heads, compute_dtype=jnp.bfloat16)
    jax.block_until_ready(ybf)
    assert ybf.shape == (batch, seq, d_model)
    errbf = float(jnp.max(jnp.abs(ybf.astype(jnp.float32) - ref)))
    assert jnp.allclose(ybf.astype(jnp.float32), ref, atol=6e-2, rtol=6e-2), errbf

    print("KERNEL_OK")
</pallas_src>

<mosaic_0001>
module attributes {stable_mosaic.version = 11 : i64} {
  func.func @_qkv_proj_kernel(%arg0: i32, %arg1: i32, %arg2: memref<16x32xf32, #tpu.memory_space<vmem>>, %arg3: memref<16x32xf32, #tpu.memory_space<vmem>>, %arg4: memref<16x32xf32, #tpu.memory_space<vmem>>, %arg5: memref<3x32x32xf32, #tpu.memory_space<vmem>>, %arg6: memref<3x1x32xf32, #tpu.memory_space<vmem>>, %arg7: memref<3x16x32xf32, #tpu.memory_space<vmem>>) attributes {dimension_semantics = [#tpu.dimension_semantics<parallel>, #tpu.dimension_semantics<parallel>], iteration_bounds = array<i64: 1, 1>, scalar_prefetch = 0 : i64, scratch_operands = 0 : i64, tpu.core_type = #tpu.core_type<tc>, window_params = [{transform_indices = @transform_0, window_bounds = array<i64: 16, 32>}, {transform_indices = @transform_1, window_bounds = array<i64: 16, 32>}, {transform_indices = @transform_2, window_bounds = array<i64: 16, 32>}, {transform_indices = @transform_3, window_bounds = array<i64: 3, 32, 32>}, {transform_indices = @transform_4, window_bounds = array<i64: 3, 1, 32>}, {transform_indices = @transform_5, window_bounds = array<i64: 3, 16, 32>}]} {
    %c0 = arith.constant 0 : index
    %c0_0 = arith.constant 0 : index
    %0 = vector.load %arg2[%c0, %c0_0] : memref<16x32xf32, #tpu.memory_space<vmem>>, vector<16x32xf32>
    %c0_1 = arith.constant 0 : index
    %c0_2 = arith.constant 0 : index
    %c0_3 = arith.constant 0 : index
    %1 = vector.load %arg5[%c0_1, %c0_2, %c0_3] : memref<3x32x32xf32, #tpu.memory_space<vmem>>, vector<1x32x32xf32>
    %2 = vector.shape_cast %1 : vector<1x32x32xf32> to vector<32x32xf32>
    %cst = arith.constant dense<0.000000e+00> : vector<16x32xf32>
    %3 = tpu.matmul %0, %2, %cst {dimension_numbers = #tpu.dot_dimension_numbers<[1], [0], [0], [1], [0, 0, 1, 1], [], []>} : vector<16x32xf32>, vector<32x32xf32>, vector<16x32xf32> -> vector<16x32xf32>
    %c0_4 = arith.constant 0 : index
    %c0_5 = arith.constant 0 : index
    %c0_6 = arith.constant 0 : index
    %4 = vector.load %arg6[%c0_4, %c0_5, %c0_6] : memref<3x1x32xf32, #tpu.memory_space<vmem>>, vector<1x1x32xf32>
    %5 = vector.shape_cast %4 : vector<1x1x32xf32> to vector<1x32xf32>
    %6 = vector.broadcast %5 : vector<1x32xf32> to vector<16x32xf32>
    %7 = arith.addf %3, %6 : vector<16x32xf32>
    %c0_7 = arith.constant 0 : index
    %c0_8 = arith.constant 0 : index
    %c0_9 = arith.constant 0 : index
    %8 = vector.load %arg7[%c0_7, %c0_8, %c0_9] : memref<3x16x32xf32, #tpu.memory_space<vmem>>, vector<1x16x32xf32>
    %9 = vector.shape_cast %8 : vector<1x16x32xf32> to vector<16x32xf32>
    %10 = vector.shape_cast %7 : vector<16x32xf32> to vector<1x16x32xf32>
    tpu.vector_store %arg7[%c0_7, %c0_8, %c0_9], %10 {strides = array<i32>} : memref<3x16x32xf32, #tpu.memory_space<vmem>>, vector<1x16x32xf32>,
    %c0_10 = arith.constant 0 : index
    %c0_11 = arith.constant 0 : index
    %11 = vector.load %arg3[%c0_10, %c0_11] : memref<16x32xf32, #tpu.memory_space<vmem>>, vector<16x32xf32>
    %c1 = arith.constant 1 : index
    %c0_12 = arith.constant 0 : index
    %c0_13 = arith.constant 0 : index
    %12 = vector.load %arg5[%c1, %c0_12, %c0_13] : memref<3x32x32xf32, #tpu.memory_space<vmem>>, vector<1x32x32xf32>
    %13 = vector.shape_cast %12 : vector<1x32x32xf32> to vector<32x32xf32>
    %cst_14 = arith.constant dense<0.000000e+00> : vector<16x32xf32>
    %14 = tpu.matmul %11, %13, %cst_14 {dimension_numbers = #tpu.dot_dimension_numbers<[1], [0], [0], [1], [0, 0, 1, 1], [], []>} : vector<16x32xf32>, vector<32x32xf32>, vector<16x32xf32> -> vector<16x32xf32>
    %c1_15 = arith.constant 1 : index
    %c0_16 = arith.constant 0 : index
    %c0_17 = arith.constant 0 : index
    %15 = vector.load %arg6[%c1_15, %c0_16, %c0_17] : memref<3x1x32xf32, #tpu.memory_space<vmem>>, vector<1x1x32xf32>
    %16 = vector.shape_cast %15 : vector<1x1x32xf32> to vector<1x32xf32>
    %17 = vector.broadcast %16 : vector<1x32xf32> to vector<16x32xf32>
    %18 = arith.addf %14, %17 : vector<16x32xf32>
    %c1_18 = arith.constant 1 : index
    %c0_19 = arith.constant 0 : index
    %c0_20 = arith.constant 0 : index
    %19 = vector.load %arg7[%c1_18, %c0_19, %c0_20] : memref<3x16x32xf32, #tpu.memory_space<vmem>>, vector<1x16x32xf32>
    %20 = vector.shape_cast %19 : vector<1x16x32xf32> to vector<16x32xf32>
    %21 = vector.shape_cast %18 : vector<16x32xf32> to vector<1x16x32xf32>
    tpu.vector_store %arg7[%c1_18, %c0_19, %c0_20], %21 {strides = array<i32>} : memref<3x16x32xf32, #tpu.memory_space<vmem>>, vector<1x16x32xf32>,
    %c0_21 = arith.constant 0 : index
    %c0_22 = arith.constant 0 : index
    %22 = vector.load %arg4[%c0_21, %c0_22] : memref<16x32xf32, #tpu.memory_space<vmem>>, vector<16x32xf32>
    %c2 = arith.constant 2 : index
    %c0_23 = arith.constant 0 : index
    %c0_24 = arith.constant 0 : index
    %23 = vector.load %arg5[%c2, %c0_23, %c0_24] : memref<3x32x32xf32, #tpu.memory_space<vmem>>, vector<1x32x32xf32>
    %24 = vector.shape_cast %23 : vector<1x32x32xf32> to vector<32x32xf32>
    %cst_25 = arith.constant dense<0.000000e+00> : vector<16x32xf32>
    %25 = tpu.matmul %22, %24, %cst_25 {dimension_numbers = #tpu.dot_dimension_numbers<[1], [0], [0], [1], [0, 0, 1, 1], [], []>} : vector<16x32xf32>, vector<32x32xf32>, vector<16x32xf32> -> vector<16x32xf32>
    %c2_26 = arith.constant 2 : index
    %c0_27 = arith.constant 0 : index
    %c0_28 = arith.constant 0 : index
    %26 = vector.load %arg6[%c2_26, %c0_27, %c0_28] : memref<3x1x32xf32, #tpu.memory_space<vmem>>, vector<1x1x32xf32>
    %27 = vector.shape_cast %26 : vector<1x1x32xf32> to vector<1x32xf32>
    %28 = vector.broadcast %27 : vector<1x32xf32> to vector<16x32xf32>
    %29 = arith.addf %25, %28 : vector<16x32xf32>
    %c2_29 = arith.constant 2 : index
    %c0_30 = arith.constant 0 : index
    %c0_31 = arith.constant 0 : index
    %30 = vector.load %arg7[%c2_29, %c0_30, %c0_31] : memref<3x16x32xf32, #tpu.memory_space<vmem>>, vector<1x16x32xf32>
    %31 = vector.shape_cast %30 : vector<1x16x32xf32> to vector<16x32xf32>
    %32 = vector.shape_cast %29 : vector<16x32xf32> to vector<1x16x32xf32>
    tpu.vector_store %arg7[%c2_29, %c0_30, %c0_31], %32 {strides = array<i32>} : memref<3x16x32xf32, #tpu.memory_space<vmem>>, vector<1x16x32xf32>,
    return
  }
  func.func @transform_0(%arg0: i32, %arg1: i32) -> (i32, i32) {
    %c0_i32 = arith.constant 0 : i32
    %c0_i32_0 = arith.constant 0 : i32
    return %arg1, %c0_i32 : i32, i32
  }
  func.func @transform_1(%arg0: i32, %arg1: i32) -> (i32, i32) {
    %c0_i32 = arith.constant 0 : i32
    %c0_i32_0 = arith.constant 0 : i32
    return %arg1, %c0_i32 : i32, i32
  }
  func.func @transform_2(%arg0: i32, %arg1: i32) -> (i32, i32) {
    %c0_i32 = arith.constant 0 : i32
    %c0_i32_0 = arith.constant 0 : i32
    return %arg1, %c0_i32 : i32, i32
  }
  func.func @transform_3(%arg0: i32, %arg1: i32) -> (i32, i32, i32) {
    %c0_i32 = arith.constant 0 : i32
    %c0_i32_0 = arith.constant 0 : i32
    %c0_i32_1 = arith.constant 0 : i32
    return %c0_i32, %c0_i32_0, %arg0 : i32, i32, i32
  }
  func.func @transform_4(%arg0: i32, %arg1: i32) -> (i32, i32, i32) {
    %c0_i32 = arith.constant 0 : i32
    %c0_i32_0 = arith.constant 0 : i32
    %c0_i32_1 = arith.constant 0 : i32
    return %c0_i32, %c0_i32_0, %arg0 : i32, i32, i32
  }
  func.func @transform_5(%arg0: i32, %arg1: i32) -> (i32, i32, i32) {
    %c0_i32 = arith.constant 0 : i32
    %c0_i32_0 = arith.constant 0 : i32
    return %c0_i32, %arg1, %arg0 : i32, i32, i32
  }
}

</mosaic_0001>

<llo_original>
// kernel: tpu_custom_call.1
$region0: #{tpu_custom_call.1}
  #allocation0 [shape = 'u32[]', space=smem, size = 0x4, offset = 0x4, fixed_abs, tag = 'smem constant byte address 0x4 - core index']
  #allocation1 [shape = 'u32[144,128]{1,0:T(1,128)}', space=vmem, size = 0x12000, scoped, tag = 'internal scratch']
  %s0 = inlined_call_operand.hbm [shape: f32[16,32], index: 0, kind: input, shape index: {}]
  %s1 = inlined_call_operand.hbm [shape: f32[16,32], index: 1, kind: input, shape index: {}]
  %s2 = inlined_call_operand.hbm [shape: f32[16,32], index: 2, kind: input, shape index: {}]
  %s3 = inlined_call_operand.hbm [shape: f32[3,32,32], index: 3, kind: input, shape index: {}]
  %s4 = inlined_call_operand.vmem [shape: f32[3,1,32], index: 4, kind: input, shape index: {}]
  %s5 = inlined_call_operand.hbm [shape: f32[3,16,32], index: 5, kind: output, shape index: {}]
  %s6 = sld [smem:[#allocation0]]
  $region46: #{tpu_custom_call.1} parent=0
    _
  %s8 = ssub.s32 1, %s6
  %s9 = scalar_select 0, %s8, %s6
  $region1: #{tpu_custom_call.1} parent=0
    #allocation2 [shape = 'u8[8192]{0}', space=vmem, size = 0x2000, scoped, tag = 'input window, operand 0, single buffered']
    #allocation3 [shape = 's32[1]{0}', space=sflag, size = 0x4, scoped, tag = 'scoped memory for tpu_custom_call.1']
    #allocation4 [shape = 's32[1]{0}', space=sflag, size = 0x4, scoped, tag = 'scoped memory for tpu_custom_call.1']
    #allocation5 [shape = 'u8[8192]{0}', space=vmem, size = 0x2000, scoped, tag = 'input window, operand 1, single buffered']
    #allocation6 [shape = 's32[1]{0}', space=sflag, size = 0x4, scoped, tag = 'scoped memory for tpu_custom_call.1']
    #allocation7 [shape = 'u8[8192]{0}', space=vmem, size = 0x2000, scoped, tag = 'input window, operand 2, single buffered']
    #allocation8 [shape = 'u8[49152]{0}', space=vmem, size = 0xc000, scoped, tag = 'input window, operand 3, single buffered']
    #allocation9 [shape = 's32[1]{0}', space=sflag, size = 0x4, scoped, tag = 'scoped memory for tpu_custom_call.1']
    #allocation10 [shape = 'u8[24576]{0}', space=vmem, size = 0x6000, scoped, tag = 'output window, operand 0, single buffered']
    %10 = vsyncpa [#allocation3], 0
    %11 = vsyncpa [#allocation6], 0
    %12 = vsyncpa [#allocation9], 0
    %13 = vsyncpa [#allocation4], 0
    // Predicated region
    $region2: #{tpu_custom_call.1} parent=1 // pred_check
      _
    $region3: #{tpu_custom_call.1} parent=1 // pred_check_branch
      %15 = sbr.rel (0) target = $region5
    $region4: #{tpu_custom_call.1} parent=1 // pred_region
      %s17 = ssub.s32 256, 256
      %18 = vsyncadd [#allocation3], %s17
      %s19 = sshll.u32 [#allocation2], 4
      %s20 = int_to_ptr.vmem [resolvable:$true] %s19
      %25 = dma.hbm_to_vmem [thread:$0]  %s0, 256, %s20, [#allocation3], 128, 128, 8
    $region5: #{tpu_custom_call.1} parent=1 // pred_fallthru
      _
    // Predicated region
    $region6: #{tpu_custom_call.1} parent=1 // pred_check
      _
    $region7: #{tpu_custom_call.1} parent=1 // pred_check_branch
      %27 = sbr.rel (0) target = $region9
    $region8: #{tpu_custom_call.1} parent=1 // pred_region
      %s29 = ssub.s32 256, 256
      %30 = vsyncadd [#allocation6], %s29
      %s31 = sshll.u32 [#allocation5], 4
      %s32 = int_to_ptr.vmem [resolvable:$true] %s31
      %37 = dma.hbm_to_vmem [thread:$0]  %s1, 256, %s32, [#allocation6], 128, 128, 8
    $region9: #{tpu_custom_call.1} parent=1 // pred_fallthru
      _
    // Predicated region
    $region10: #{tpu_custom_call.1} parent=1 // pred_check
      _
    $region11: #{tpu_custom_call.1} parent=1 // pred_check_branch
      %39 = sbr.rel (0) target = $region13
    $region12: #{tpu_custom_call.1} parent=1 // pred_region
      %s41 = ssub.s32 256, 256
      %42 = vsyncadd [#allocation6], %s41
      %s43 = sshll.u32 [#allocation7], 4
      %s44 = int_to_ptr.vmem [resolvable:$true] %s43
      %49 = dma.hbm_to_vmem [thread:$0]  %s2, 256, %s44, [#allocation6], 128, 128, 8
    $region13: #{tpu_custom_call.1} parent=1 // pred_fallthru
      _
    // Predicated region
    $region14: #{tpu_custom_call.1} parent=1 // pred_check
      _
    $region15: #{tpu_custom_call.1} parent=1 // pred_check_branch
      %51 = sbr.rel (0) target = $region17
    $region16: #{tpu_custom_call.1} parent=1 // pred_region
      %s53 = ssub.s32 1536, 1536
      %54 = vsyncadd [#allocation9], %s53
      %s55 = sshll.u32 [#allocation8], 4
      %s56 = int_to_ptr.vmem [resolvable:$true] %s55
      %61 = dma.hbm_to_vmem [thread:$0]  %s3, 1536, %s56, [#allocation9], 128, 128, 8
    $region17: #{tpu_custom_call.1} parent=1 // pred_fallthru
      _
    // Predicated region
    $region18: #{tpu_custom_call.1} parent=1 // pred_check
      _
    $region19: #{tpu_custom_call.1} parent=1 // pred_check_branch
      %63 = sbr.rel (0) target = $region21
    $region20: #{tpu_custom_call.1} parent=1 // pred_region
      _
    $region21: #{tpu_custom_call.1} parent=1 // pred_fallthru
      _
    // Predicated region
    $region22: #{tpu_custom_call.1} parent=1 // pred_check
      _
    $region23: #{tpu_custom_call.1} parent=1 // pred_check_branch
      %65 = sbr.rel (0) target = $region25
    $region24: #{tpu_custom_call.1} parent=1 // pred_region
      %66 = dma.done [#allocation3], 256
    $region25: #{tpu_custom_call.1} parent=1 // pred_fallthru
      _
    // Predicated region
    $region26: #{tpu_custom_call.1} parent=1 // pred_check
      _
    $region27: #{tpu_custom_call.1} parent=1 // pred_check_branch
      %68 = sbr.rel (0) target = $region29
    $region28: #{tpu_custom_call.1} parent=1 // pred_region
      %69 = dma.done [#allocation6], 256
    $region29: #{tpu_custom_call.1} parent=1 // pred_fallthru
      _
    // Predicated region
    $region30: #{tpu_custom_call.1} parent=1 // pred_check
      _
    $region31: #{tpu_custom_call.1} parent=1 // pred_check_branch
      %71 = sbr.rel (0) target = $region33
    $region32: #{tpu_custom_call.1} parent=1 // pred_region
      %72 = dma.done [#allocation6], 256
    $region33: #{tpu_custom_call.1} parent=1 // pred_fallthru
      _
    // Predicated region
    $region34: #{tpu_custom_call.1} parent=1 // pred_check
      _
    $region35: #{tpu_custom_call.1} parent=1 // pred_check_branch
      %74 = sbr.rel (0) target = $region37
    $region36: #{tpu_custom_call.1} parent=1 // pred_region
      %75 = dma.done [#allocation9], 1536
    $region37: #{tpu_custom_call.1} parent=1 // pred_fallthru
      _
    %v76 = vld [vmem:[#allocation2] sm:$0xff]
    %v77 = vld [vmem:[#allocation2 + $0x8] sm:$0xff]
    %v78 = vld [vmem:[#allocation8] sm:$0xff]
    %v79 = vld [vmem:[#allocation8 + $0x8] sm:$0xff]
    %v80 = vld [vmem:[#allocation8 + $0x10] sm:$0xff]
    %v81 = vld [vmem:[#allocation8 + $0x18] sm:$0xff]
    %v82 = vld [vmem:[%s4] sm:$0x1]
    %v84 = vlaneseq
    %v85 = vshrl.u32 %v84, 7
    %v86 = vsub.s32 0, %v85
    %v87 = vrot.slane %v82, %v86
    %vm89 = vcmask 261120
    %v91 = vsel %vm89, %v76, 0
    %v94 = vsel %vm89, %v77, 0
    %96 = vmatprep.subr.mxu0 0.0
    %97 = vmatpush1.msra.mxu0 %v78
    %98 = vmatprep.subr.mxu0 0.0
    %99 = vmatpush1.msra.mxu0 %v79
    %100 = vmatprep.subr.mxu0 0.0
    %101 = vmatpush1.msra.mxu0 %v80
    %102 = vmatprep.subr.mxu0 0.0
    %103 = vmatpush1.msra.mxu0 %v81
    %104 = vmatprep.subr.mxu0 0.0
    %105 = vmatpush1.msra.mxu0 0.0
    %106 = vmatprep.subr.mxu0 0.0
    %107 = vmatpush1.msra.mxu0 0.0
    %108 = vmatprep.subr.mxu0 0.0
    %109 = vmatpush1.msra.mxu0 0.0
    %110 = vmatprep.subr.mxu0 0.0
    %111 = vmatpush1.msra.mxu0 0.0
    %112 = vmatprep.subr.mxu0 0.0
    %113 = vmatpush1.msra.mxu0 0.0
    %114 = vmatprep.subr.mxu0 0.0
    %115 = vmatpush1.msra.mxu0 0.0
    %116 = vmatprep.subr.mxu0 0.0
    %117 = vmatpush1.msra.mxu0 0.0
    %118 = vmatprep.subr.mxu0 0.0
    %119 = vmatpush1.msra.mxu0 0.0
    %120 = vmatprep.subr.mxu0 0.0
    %121 = vmatpush1.msra.mxu0 0.0
    %122 = vmatprep.subr.mxu0 0.0
    %123 = vmatpush1.msra.mxu0 0.0
    %124 = vmatprep.subr.mxu0 0.0
    %125 = vmatpush1.msra.mxu0 0.0
    %126 = vmatprep.subr.mxu0 0.0
    %127 = vmatpush1.msra.mxu0 0.0
    %128 = vmatprep.subr.mxu0 0.0
    %129 = vmatpush1.msra.mxu0 0.0
    %130 = vmatprep.subr.mxu0 0.0
    %131 = vmatpush1.msra.mxu0 0.0
    %132 = vmatprep.subr.mxu0 0.0
    %133 = vmatpush1.msra.mxu0 0.0
    %134 = vmatprep.subr.mxu0 0.0
    %135 = vmatpush1.msra.mxu0 0.0
    %136 = vmatprep.subr.mxu0 0.0
    %137 = vmatpush1.msra.mxu0 0.0
    %138 = vmatprep.subr.mxu0 0.0
    %139 = vmatpush1.msra.mxu0 0.0
    %140 = vmatprep.subr.mxu0 0.0
    %141 = vmatpush1.msra.mxu0 0.0
    %142 = vmatprep.subr.mxu0 0.0
    %143 = vmatpush1.msra.mxu0 0.0
    %144 = vmatprep.subr.mxu0 0.0
    %145 = vmatpush1.msra.mxu0 0.0
    %146 = vmatprep.subr.mxu0 0.0
    %147 = vmatpush1.msra.mxu0 0.0
    %148 = vmatprep.subr.mxu0 0.0
    %149 = vmatpush1.msra.mxu0 0.0
    %150 = vmatprep.subr.mxu0 0.0
    %151 = vmatpush1.msra.mxu0 0.0
    %152 = vmatprep.subr.mxu0 0.0
    %153 = vmatpush1.msra.mxu0 0.0
    %154 = vmatprep.subr.mxu0 0.0
    %155 = vmatpush1.msra.mxu0 0.0
    %156 = vmatprep.subr.mxu0 0.0
    %157 = vmatpush1.msra.mxu0 0.0
    %158 = vmatprep.subr.mxu0 0.0
    %159 = vmatpush1.msra.mxu0 0.0
    %160 = vmatprep.mubr.f32.mxu0 0.0
    %161 = vmatmul.mubr.f32.gmra.mrb[0].mxu0 %v91
    %v162 = vpop.f32.mrb[0].mxu0
    %v163 = vadd.f32 %v87, %v162
    %v164 = vpop.f32.mrb[0].mxu0
    %165 = vmatprep.mubr.f32.mxu0 0.0
    %166 = vmatmul.mubr.f32.gmra.mrb[0].mxu0 %v94
    %v167 = vpop.f32.mrb[0].mxu0
    %v168 = vadd.f32 %v87, %v167
    %v169 = vpop.f32.mrb[0].mxu0
    %170 = vdwg.mxu0
    %171 = vst.msk [vmem:[#allocation10] sm:$0xff] %vm89, %v163
    %172 = vst.msk [vmem:[#allocation10 + $0x8] sm:$0xff] %vm89, %v168
    %v173 = vld [vmem:[#allocation5] sm:$0xff]
    %v174 = vld [vmem:[#allocation5 + $0x8] sm:$0xff]
    %s175 = scalar_lea.vmem [#allocation8], 32
    %v176 = vld [vmem:[%s175] sm:$0xff]
    %v177 = vld [vmem:[%s175 + $0x8] sm:$0xff]
    %v178 = vld [vmem:[%s175 + $0x10] sm:$0xff]
    %v179 = vld [vmem:[%s175 + $0x18] sm:$0xff]
    %s180 = scalar_lea.vmem %s4, 1
    %v181 = vld [vmem:[%s180] sm:$0x1]
    %v183 = vlaneseq
    %v184 = vshrl.u32 %v183, 7
    %v185 = vsub.s32 0, %v184
    %v186 = vrot.slane %v181, %v185
    %v189 = vsel %vm89, %v173, 0
    %v192 = vsel %vm89, %v174, 0
    %194 = vmatprep.subr.mxu0 0.0
    %195 = vmatpush1.msra.mxu0 %v176
    %196 = vmatprep.subr.mxu0 0.0
    %197 = vmatpush1.msra.mxu0 %v177
    %198 = vmatprep.subr.mxu0 0.0
    %199 = vmatpush1.msra.mxu0 %v178
    %200 = vmatprep.subr.mxu0 0.0
    %201 = vmatpush1.msra.mxu0 %v179
    %202 = vmatprep.subr.mxu0 0.0
    %203 = vmatpush1.msra.mxu0 0.0
    %204 = vmatprep.subr.mxu0 0.0
    %205 = vmatpush1.msra.mxu0 0.0
    %206 = vmatprep.subr.mxu0 0.0
    %207 = vmatpush1.msra.mxu0 0.0
    %208 = vmatprep.subr.mxu0 0.0
    %209 = vmatpush1.msra.mxu0 0.0
    %210 = vmatprep.subr.mxu0 0.0
    %211 = vmatpush1.msra.mxu0 0.0
    %212 = vmatprep.subr.mxu0 0.0
    %213 = vmatpush1.msra.mxu0 0.0
    %214 = vmatprep.subr.mxu0 0.0
    %215 = vmatpush1.msra.mxu0 0.0
    %216 = vmatprep.subr.mxu0 0.0
    %217 = vmatpush1.msra.mxu0 0.0
    %218 = vmatprep.subr.mxu0 0.0
    %219 = vmatpush1.msra.mxu0 0.0
    %220 = vmatprep.subr.mxu0 0.0
    %221 = vmatpush1.msra.mxu0 0.0
    %222 = vmatprep.subr.mxu0 0.0
    %223 = vmatpush1.msra.mxu0 0.0
    %224 = vmatprep.subr.mxu0 0.0
    %225 = vmatpush1.msra.mxu0 0.0
    %226 = vmatprep.subr.mxu0 0.0
    %227 = vmatpush1.msra.mxu0 0.0
    %228 = vmatprep.subr.mxu0 0.0
    %229 = vmatpush1.msra.mxu0 0.0
    %230 = vmatprep.subr.mxu0 0.0
    %231 = vmatpush1.msra.mxu0 0.0
    %232 = vmatprep.subr.mxu0 0.0
    %233 = vmatpush1.msra.mxu0 0.0
    %234 = vmatprep.subr.mxu0 0.0
    %235 = vmatpush1.msra.mxu0 0.0
    %236 = vmatprep.subr.mxu0 0.0
    %237 = vmatpush1.msra.mxu0 0.0
    %238 = vmatprep.subr.mxu0 0.0
    %239 = vmatpush1.msra.mxu0 0.0
    %240 = vmatprep.subr.mxu0 0.0
    %241 = vmatpush1.msra.mxu0 0.0
    %242 = vmatprep.subr.mxu0 0.0
    %243 = vmatpush1.msra.mxu0 0.0
    %244 = vmatprep.subr.mxu0 0.0
    %245 = vmatpush1.msra.mxu0 0.0
    %246 = vmatprep.subr.mxu0 0.0
    %247 = vmatpush1.msra.mxu0 0.0
    %248 = vmatprep.subr.mxu0 0.0
    %249 = vmatpush1.msra.mxu0 0.0
    %250 = vmatprep.subr.mxu0 0.0
    %251 = vmatpush1.msra.mxu0 0.0
    %252 = vmatprep.subr.mxu0 0.0
    %253 = vmatpush1.msra.mxu0 0.0
    %254 = vmatprep.subr.mxu0 0.0
    %255 = vmatpush1.msra.mxu0 0.0
    %256 = vmatprep.subr.mxu0 0.0
    %257 = vmatpush1.msra.mxu0 0.0
    %258 = vmatprep.mubr.f32.mxu0 0.0
    %259 = vmatmul.mubr.f32.gmra.mrb[0].mxu0 %v189
    %v260 = vpop.f32.mrb[0].mxu0
    %v261 = vadd.f32 %v186, %v260
    %v262 = vpop.f32.mrb[0].mxu0
    %263 = vmatprep.mubr.f32.mxu0 0.0
    %264 = vmatmul.mubr.f32.gmra.mrb[0].mxu0 %v192
    %v265 = vpop.f32.mrb[0].mxu0
    %v266 = vadd.f32 %v186, %v265
    %v267 = vpop.f32.mrb[0].mxu0
    %268 = vdwg.mxu0
    %s269 = scalar_lea.vmem [#allocation10], 16
    %270 = vst.msk [vmem:[%s269] sm:$0xff] %vm89, %v261
    %271 = vst.msk [vmem:[%s269 + $0x8] sm:$0xff] %vm89, %v266
    %v272 = vld [vmem:[#allocation7] sm:$0xff]
    %v273 = vld [vmem:[#allocation7 + $0x8] sm:$0xff]
    %s274 = scalar_lea.vmem [#allocation8], 64
    %v275 = vld [vmem:[%s274] sm:$0xff]
    %v276 = vld [vmem:[%s274 + $0x8] sm:$0xff]
    %v277 = vld [vmem:[%s274 + $0x10] sm:$0xff]
    %v278 = vld [vmem:[%s274 + $0x18] sm:$0xff]
    %s279 = scalar_lea.vmem %s4, 2
    %v280 = vld [vmem:[%s279] sm:$0x1]
    %v282 = vlaneseq
    %v283 = vshrl.u32 %v282, 7
    %v284 = vsub.s32 0, %v283
    %v285 = vrot.slane %v280, %v284
    %v288 = vsel %vm89, %v272, 0
    %v291 = vsel %vm89, %v273, 0
    %293 = vmatprep.subr.mxu0 0.0
    %294 = vmatpush1.msra.mxu0 %v275
    %295 = vmatprep.subr.mxu0 0.0
    %296 = vmatpush1.msra.mxu0 %v276
    %297 = vmatprep.subr.mxu0 0.0
    %298 = vmatpush1.msra.mxu0 %v277
    %299 = vmatprep.subr.mxu0 0.0
    %300 = vmatpush1.msra.mxu0 %v278
    %301 = vmatprep.subr.mxu0 0.0
    %302 = vmatpush1.msra.mxu0 0.0
    %303 = vmatprep.subr.mxu0 0.0
    %304 = vmatpush1.msra.mxu0 0.0
    %305 = vmatprep.subr.mxu0 0.0
    %306 = vmatpush1.msra.mxu0 0.0
    %307 = vmatprep.subr.mxu0 0.0
    %308 = vmatpush1.msra.mxu0 0.0
    %309 = vmatprep.subr.mxu0 0.0
    %310 = vmatpush1.msra.mxu0 0.0
    %311 = vmatprep.subr.mxu0 0.0
    %312 = vmatpush1.msra.mxu0 0.0
    %313 = vmatprep.subr.mxu0 0.0
    %314 = vmatpush1.msra.mxu0 0.0
    %315 = vmatprep.subr.mxu0 0.0
    %316 = vmatpush1.msra.mxu0 0.0
    %317 = vmatprep.subr.mxu0 0.0
    %318 = vmatpush1.msra.mxu0 0.0
    %319 = vmatprep.subr.mxu0 0.0
    %320 = vmatpush1.msra.mxu0 0.0
    %321 = vmatprep.subr.mxu0 0.0
    %322 = vmatpush1.msra.mxu0 0.0
    %323 = vmatprep.subr.mxu0 0.0
    %324 = vmatpush1.msra.mxu0 0.0
    %325 = vmatprep.subr.mxu0 0.0
    %326 = vmatpush1.msra.mxu0 0.0
    %327 = vmatprep.subr.mxu0 0.0
    %328 = vmatpush1.msra.mxu0 0.0
    %329 = vmatprep.subr.mxu0 0.0
    %330 = vmatpush1.msra.mxu0 0.0
    %331 = vmatprep.subr.mxu0 0.0
    %332 = vmatpush1.msra.mxu0 0.0
    %333 = vmatprep.subr.mxu0 0.0
    %334 = vmatpush1.msra.mxu0 0.0
    %335 = vmatprep.subr.mxu0 0.0
    %336 = vmatpush1.msra.mxu0 0.0
    %337 = vmatprep.subr.mxu0 0.0
    %338 = vmatpush1.msra.mxu0 0.0
    %339 = vmatprep.subr.mxu0 0.0
    %340 = vmatpush1.msra.mxu0 0.0
    %341 = vmatprep.subr.mxu0 0.0
    %342 = vmatpush1.msra.mxu0 0.0
    %343 = vmatprep.subr.mxu0 0.0
    %344 = vmatpush1.msra.mxu0 0.0
    %345 = vmatprep.subr.mxu0 0.0
    %346 = vmatpush1.msra.mxu0 0.0
    %347 = vmatprep.subr.mxu0 0.0
    %348 = vmatpush1.msra.mxu0 0.0
    %349 = vmatprep.subr.mxu0 0.0
    %350 = vmatpush1.msra.mxu0 0.0
    %351 = vmatprep.subr.mxu0 0.0
    %352 = vmatpush1.msra.mxu0 0.0
    %353 = vmatprep.subr.mxu0 0.0
    %354 = vmatpush1.msra.mxu0 0.0
    %355 = vmatprep.subr.mxu0 0.0
    %356 = vmatpush1.msra.mxu0 0.0
    %357 = vmatprep.mubr.f32.mxu0 0.0
    %358 = vmatmul.mubr.f32.gmra.mrb[0].mxu0 %v288
    %v359 = vpop.f32.mrb[0].mxu0
    %v360 = vadd.f32 %v285, %v359
    %v361 = vpop.f32.mrb[0].mxu0
    %362 = vmatprep.mubr.f32.mxu0 0.0
    %363 = vmatmul.mubr.f32.gmra.mrb[0].mxu0 %v291
    %v364 = vpop.f32.mrb[0].mxu0
    %v365 = vadd.f32 %v285, %v364
    %v366 = vpop.f32.mrb[0].mxu0
    %367 = vdwg.mxu0
    %s368 = scalar_lea.vmem [#allocation10], 32
    %369 = vst.msk [vmem:[%s368] sm:$0xff] %vm89, %v360
    %370 = vst.msk [vmem:[%s368 + $0x8] sm:$0xff] %vm89, %v365
    // Predicated region
    $region38: #{tpu_custom_call.1} parent=1 // pred_check
      _
    $region39: #{tpu_custom_call.1} parent=1 // pred_check_branch
      %372 = sbr.rel (0) target = $region41
    $region40: #{tpu_custom_call.1} parent=1 // pred_region
      %s374 = ssub.s32 768, 768
      %375 = vsyncadd [#allocation4], %s374
      %s376 = sshll.u32 [#allocation10], 4
      %s377 = int_to_ptr.vmem [resolvable:$true] %s376
      %382 = dma.vmem_to_hbm [thread:$0]  %s377, 768, %s5, [#allocation4], 128, 128, 8
    $region41: #{tpu_custom_call.1} parent=1 // pred_fallthru
      _
    // Predicated region
    $region42: #{tpu_custom_call.1} parent=1 // pred_check
      _
    $region43: #{tpu_custom_call.1} parent=1 // pred_check_branch
      %384 = sbr.rel (0) target = $region45
    $region44: #{tpu_custom_call.1} parent=1 // pred_region
      %385 = dma.done [#allocation4], 768
    $region45: #{tpu_custom_call.1} parent=1 // pred_fallthru
      _
    %386 = vsyncpa [#allocation3], 1
    %387 = vsyncpa [#allocation6], 1
    %388 = vsyncpa [#allocation9], 1
    %389 = vsyncpa [#allocation4], 1

</llo_original>
